<compile_context>
chip_gen: v7x
topology: tpu7x:2x2x1
jax: 0.10.0
libtpu: 0.0.40
codegen_flags: <defaults>
</compile_context>

<pallas_src>
import functools

import jax
import jax.numpy as jnp
from jax import lax
from jax.experimental import pallas as pl
from jax.experimental.pallas import tpu as pltpu


def _stacked_conv1d_kernel(x_ref, mask_ref, w_ref, b_ref, o_ref, *,
                           layers_n: int, kernel_size: int, pad: int,
                           negative_slope: float):
    # x_ref   : (C, N)  pre-padded, batch-flattened activation slab for this batch tile
    # mask_ref: (1, N)  1.0 on data columns, 0.0 on per-segment pad columns
    # w_ref   : (layers_n, K, C_out, C_in)  per-tap matmul weights (bf16)
    # b_ref   : (layers_n, C, 1)            biases (f32)
    # o_ref   : (C, N)
    C, N = x_ref.shape
    mask = mask_ref[...].astype(jnp.float32)         # (1, N), hoisted out of the layer loop
    mm_dtype = w_ref.dtype                           # bf16 operands for the MXU
    lanes_aligned = (N % 128 == 0)

    def tap(slab_mm, s):
        # Circular shift == zero-padded shift here: with |s| <= pad the wrapped-around
        # columns are the pad zeros at the slab ends, so this reproduces Conv1d "same"
        # zero padding exactly for every batch segment.
        if s == 0:
            return slab_mm
        amt = (-s) % N                               # non-negative static rotate amount
        if lanes_aligned:
            return pltpu.roll(slab_mm, amt, 1)       # XLU lane rotation
        return jnp.roll(slab_mm, amt, axis=1)        # slice+concat fallback (unaligned N)

    def layer_body(layer, slab):                     # slab: (C, N) f32, pad columns == 0
        w_l = w_ref[layer]                           # (K, C, C)
        b_l = b_ref[layer]                           # (C, 1)
        slab_mm = slab.astype(mm_dtype)              # single bf16 cast per layer
        acc = jnp.dot(w_l[0], tap(slab_mm, -pad),
                      preferred_element_type=jnp.float32)
        for k in range(1, kernel_size):              # static unroll over taps (K is small)
            acc = acc + jnp.dot(w_l[k], tap(slab_mm, k - pad),
                                preferred_element_type=jnp.float32)
        acc = acc + b_l                              # bias, broadcast along lanes
        act = jnp.where(acc >= 0, acc, negative_slope * acc)   # LeakyReLU (f32)
        # Dropout(p=0.0) is the identity in the forward pass.
        return slab + act * mask                     # residual; pad columns stay zero

    slab = x_ref[...].astype(jnp.float32)
    if layers_n <= 16:
        for l in range(layers_n):                    # static layer indices
            slab = layer_body(l, slab)
    else:
        slab = lax.fori_loop(0, layers_n, layer_body, slab)
    o_ref[...] = slab.astype(o_ref.dtype)


def stacked_conv1d(x, weights, biases, *, negative_slope=0.01,
                   matmul_dtype=jnp.bfloat16, batch_block=None):
    """x: (B, C, L); weights: (layers_n, C_out, C_in, K) (PyTorch Conv1d layout);
    biases: (layers_n, C)."""
    B, C, L = x.shape
    layers_n, C_out, C_in, K = weights.shape
    assert C_out == C and C_in == C
    assert K % 2 == 1, "padding=K//2 only matches PyTorch output length for odd K"
    pad = K // 2
    Lp = L + 2 * pad

    # ---- wrapper-side layout plumbing (lane-dense, batch-folded, pre-padded slab) ----
    xp = jnp.pad(x, ((0, 0), (0, 0), (pad, pad)))                 # (B, C, Lp)
    x2 = jnp.transpose(xp, (1, 0, 2)).reshape(C, B * Lp)          # (C, B*Lp)
    mask = jnp.zeros((B, Lp), jnp.float32).at[:, pad:pad + L].set(1.0)
    mask = mask.reshape(1, B * Lp)                                # (1, B*Lp)

    # weights: (l, o, c, k) -> (l, k, o, c): per-tap (C_out, C_in) matmul weights, bf16.
    w2 = jnp.transpose(weights, (0, 3, 1, 2)).astype(matmul_dtype)
    b2 = biases.reshape(layers_n, C, 1).astype(jnp.float32)

    # ---- batch tiling: whole batch per step when small, else lane-dense batch tiles ----
    if batch_block is None:
        bt = B
        if B * Lp * C * 4 > (4 << 20):        # tile only for big inputs
            for cand in range(B - 1, 0, -1):  # keep blocks a multiple of 128 lanes
                if B % cand == 0 and (cand * Lp) % 128 == 0 and cand * Lp * C * 4 <= (4 << 20):
                    bt = cand
                    break
        # TODO(synk): for very large C*L, additionally tile L with a pad-sized halo and/or
        # stream layers on a grid axis to respect v7x's 64 MiB VMEM.
    else:
        bt = batch_block
    grid = (pl.cdiv(B, bt),)
    Nb = bt * Lp

    kernel = functools.partial(_stacked_conv1d_kernel,
                               layers_n=layers_n, kernel_size=K, pad=pad,
                               negative_slope=negative_slope)

    out2 = pl.pallas_call(
        kernel,
        out_shape=jax.ShapeDtypeStruct((C, B * Lp), x.dtype),
        grid_spec=pltpu.PrefetchScalarGridSpec(
            num_scalar_prefetch=0,
            grid=grid,
            in_specs=[
                pl.BlockSpec((C, Nb), lambda b: (0, b)),                      # activation slab
                pl.BlockSpec((1, Nb), lambda b: (0, b)),                      # pad-column mask
                pl.BlockSpec((layers_n, K, C, C), lambda b: (0, 0, 0, 0)),    # per-tap weights
                pl.BlockSpec((layers_n, C, 1), lambda b: (0, 0, 0)),          # biases
            ],
            out_specs=pl.BlockSpec((C, Nb), lambda b: (0, b)),
        ),
        compiler_params=pltpu.CompilerParams(
            dimension_semantics=("parallel",)),   # disjoint batch blocks -> megacore-safe
    )(x2, mask, w2, b2)

    # undo the layout plumbing: (C, B*Lp) -> (B, C, L)
    out = out2.reshape(C, B, Lp).transpose(1, 0, 2)[:, :, pad:pad + L]
    return out


def _reference(x, weights, biases, *, negative_slope=0.01, matmul_dtype=jnp.bfloat16):
    """Pure-JAX reference mirroring the PyTorch module in f32, with the matmul operands
    rounded to `matmul_dtype` exactly as the kernel feeds the MXU (f32 accumulation)."""
    layers_n, C, _, K = weights.shape
    pad = K // 2
    wq = weights.astype(matmul_dtype).astype(jnp.float32)
    cur = x.astype(jnp.float32)
    B, _, L = x.shape
    for l in range(layers_n):
        xq = cur.astype(matmul_dtype).astype(jnp.float32)
        xpad = jnp.pad(xq, ((0, 0), (0, 0), (pad, pad)))
        y = jnp.zeros((B, C, L), jnp.float32)
        for k in range(K):
            y = y + jnp.einsum('oc,bcl->bol', wq[l, :, :, k], xpad[:, :, k:k + L],
                               precision=lax.Precision.HIGHEST)
        y = y + biases[l][None, :, None]
        y = jnp.where(y >= 0, y, negative_slope * y)     # LeakyReLU; Dropout(0.0) = id
        cur = cur + y
    return cur


def _run_case(key, *, B, C, L, layers_n, K):
    kx, kw, kb = jax.random.split(key, 3)
    x = jax.random.normal(kx, (B, C, L), dtype=jnp.float32)
    # Deterministic init mimicking PyTorch Conv1d default (uniform in +/- 1/sqrt(C*K)).
    bound = 1.0 / float(jnp.sqrt(jnp.float32(C * K)))
    weights = jax.random.uniform(kw, (layers_n, C, C, K),
                                 minval=-bound, maxval=bound, dtype=jnp.float32)
    biases = jax.random.uniform(kb, (layers_n, C),
                                minval=-bound, maxval=bound, dtype=jnp.float32)

    out = jax.block_until_ready(stacked_conv1d(x, weights, biases))
    ref = _reference(x, weights, biases)
    assert out.shape == (B, C, L)
    assert jnp.allclose(out, ref, atol=1e-3, rtol=1e-3), \
        f"mismatch vs reference (B={B} C={C} L={L} layers={layers_n} K={K})"


if __name__ == "__main__":
    key = jax.random.PRNGKey(0)
    k1, k2 = jax.random.split(key)
    # Small shapes consistent with the module's forward: B x FeaturesNum x SeqLen.
    _run_case(k1, B=2, C=8, L=16, layers_n=2, K=3)    # unaligned-lane (jnp.roll) path
    _run_case(k2, B=2, C=8, L=126, layers_n=3, K=3)   # 128-aligned lane (pltpu.roll) path
    print("KERNEL_OK")
</pallas_src>

<mosaic_0001>
module attributes {stable_mosaic.version = 11 : i64} {
  func.func @_stacked_conv1d_kernel(%arg0: i32, %arg1: memref<8x36xf32, #tpu.memory_space<vmem>>, %arg2: memref<1x36xf32, #tpu.memory_space<vmem>>, %arg3: memref<2x3x8x8xbf16, #tpu.memory_space<vmem>>, %arg4: memref<2x8x1xf32, #tpu.memory_space<vmem>>, %arg5: memref<8x36xf32, #tpu.memory_space<vmem>>) attributes {dimension_semantics = [#tpu.dimension_semantics<parallel>], iteration_bounds = array<i64: 1>, scalar_prefetch = 0 : i64, scratch_operands = 0 : i64, tpu.core_type = #tpu.core_type<tc>, window_params = [{transform_indices = @transform_0, window_bounds = array<i64: 8, 36>}, {transform_indices = @transform_1, window_bounds = array<i64: 1, 36>}, {pipeline_mode = #tpu.pipeline_mode<synchronous>, transform_indices = @transform_2, window_bounds = array<i64: 2, 3, 8, 8>}, {pipeline_mode = #tpu.pipeline_mode<synchronous>, transform_indices = @transform_3, window_bounds = array<i64: 2, 8, 1>}, {transform_indices = @transform_4, window_bounds = array<i64: 8, 36>}]} {
    %c0 = arith.constant 0 : index
    %c0_0 = arith.constant 0 : index
    %0 = vector.load %arg2[%c0, %c0_0] : memref<1x36xf32, #tpu.memory_space<vmem>>, vector<1x36xf32>
    %c0_1 = arith.constant 0 : index
    %c0_2 = arith.constant 0 : index
    %1 = vector.load %arg1[%c0_1, %c0_2] : memref<8x36xf32, #tpu.memory_space<vmem>>, vector<8x36xf32>
    %c0_3 = arith.constant 0 : index
    %c0_4 = arith.constant 0 : index
    %c0_5 = arith.constant 0 : index
    %c0_6 = arith.constant 0 : index
    %2 = vector.load %arg3[%c0_3, %c0_4, %c0_5, %c0_6] : memref<2x3x8x8xbf16, #tpu.memory_space<vmem>>, vector<1x3x8x8xbf16>
    %3 = vector.shape_cast %2 : vector<1x3x8x8xbf16> to vector<3x8x8xbf16>
    %c0_7 = arith.constant 0 : index
    %c0_8 = arith.constant 0 : index
    %c0_9 = arith.constant 0 : index
    %4 = vector.load %arg4[%c0_7, %c0_8, %c0_9] : memref<2x8x1xf32, #tpu.memory_space<vmem>>, vector<1x8x1xf32>
    %5 = vector.shape_cast %4 : vector<1x8x1xf32> to vector<8x1xf32>
    %6 = arith.truncf %1 : vector<8x36xf32> to vector<8x36xbf16>
    %7 = vector.extract_strided_slice %3 {offsets = [0, 0, 0], sizes = [1, 8, 8], strides = [1, 1, 1]} : vector<3x8x8xbf16> to vector<1x8x8xbf16>
    %8 = vector.shape_cast %7 : vector<1x8x8xbf16> to vector<8x8xbf16>
    %9 = vector.extract_strided_slice %6 {offsets = [0, 35], sizes = [8, 1], strides = [1, 1]} : vector<8x36xbf16> to vector<8x1xbf16>
    %10 = vector.extract_strided_slice %6 {offsets = [0, 0], sizes = [8, 35], strides = [1, 1]} : vector<8x36xbf16> to vector<8x35xbf16>
    %11 = tpu.concatenate %9, %10 in 1 : vector<8x1xbf16>, vector<8x35xbf16> -> vector<8x36xbf16>
    %cst = arith.constant dense<0.000000e+00> : vector<8x36xf32>
    %12 = tpu.matmul %8, %11, %cst {dimension_numbers = #tpu.dot_dimension_numbers<[1], [0], [0], [1], [0, 0, 1, 1], [], []>} : vector<8x8xbf16>, vector<8x36xbf16>, vector<8x36xf32> -> vector<8x36xf32>
    %13 = vector.extract_strided_slice %3 {offsets = [1, 0, 0], sizes = [1, 8, 8], strides = [1, 1, 1]} : vector<3x8x8xbf16> to vector<1x8x8xbf16>
    %14 = vector.shape_cast %13 : vector<1x8x8xbf16> to vector<8x8xbf16>
    %cst_10 = arith.constant dense<0.000000e+00> : vector<8x36xf32>
    %15 = tpu.matmul %14, %6, %cst_10 {dimension_numbers = #tpu.dot_dimension_numbers<[1], [0], [0], [1], [0, 0, 1, 1], [], []>} : vector<8x8xbf16>, vector<8x36xbf16>, vector<8x36xf32> -> vector<8x36xf32>
    %16 = arith.addf %12, %15 : vector<8x36xf32>
    %17 = vector.extract_strided_slice %3 {offsets = [2, 0, 0], sizes = [1, 8, 8], strides = [1, 1, 1]} : vector<3x8x8xbf16> to vector<1x8x8xbf16>
    %18 = vector.shape_cast %17 : vector<1x8x8xbf16> to vector<8x8xbf16>
    %19 = vector.extract_strided_slice %6 {offsets = [0, 1], sizes = [8, 35], strides = [1, 1]} : vector<8x36xbf16> to vector<8x35xbf16>
    %20 = vector.extract_strided_slice %6 {offsets = [0, 0], sizes = [8, 1], strides = [1, 1]} : vector<8x36xbf16> to vector<8x1xbf16>
    %21 = tpu.concatenate %19, %20 in 1 : vector<8x35xbf16>, vector<8x1xbf16> -> vector<8x36xbf16>
    %cst_11 = arith.constant dense<0.000000e+00> : vector<8x36xf32>
    %22 = tpu.matmul %18, %21, %cst_11 {dimension_numbers = #tpu.dot_dimension_numbers<[1], [0], [0], [1], [0, 0, 1, 1], [], []>} : vector<8x8xbf16>, vector<8x36xbf16>, vector<8x36xf32> -> vector<8x36xf32>
    %23 = arith.addf %16, %22 : vector<8x36xf32>
    %24 = vector.broadcast %5 : vector<8x1xf32> to vector<8x36xf32>
    %25 = arith.addf %23, %24 : vector<8x36xf32>
    %cst_12 = arith.constant 0.000000e+00 : f32
    %26 = vector.broadcast %cst_12 : f32 to vector<8x36xf32>
    %27 = arith.cmpf oge, %25, %26 : vector<8x36xf32>
    %cst_13 = arith.constant 0.00999999977 : f32
    %28 = vector.broadcast %cst_13 : f32 to vector<8x36xf32>
    %29 = arith.mulf %28, %25 : vector<8x36xf32>
    %30 = arith.select %27, %25, %29 : vector<8x36xi1>, vector<8x36xf32>
    %31 = vector.broadcast %0 : vector<1x36xf32> to vector<8x36xf32>
    %32 = arith.mulf %30, %31 : vector<8x36xf32>
    %33 = arith.addf %1, %32 : vector<8x36xf32>
    %c1 = arith.constant 1 : index
    %c0_14 = arith.constant 0 : index
    %c0_15 = arith.constant 0 : index
    %c0_16 = arith.constant 0 : index
    %34 = vector.load %arg3[%c1, %c0_14, %c0_15, %c0_16] : memref<2x3x8x8xbf16, #tpu.memory_space<vmem>>, vector<1x3x8x8xbf16>
    %35 = vector.shape_cast %34 : vector<1x3x8x8xbf16> to vector<3x8x8xbf16>
    %c1_17 = arith.constant 1 : index
    %c0_18 = arith.constant 0 : index
    %c0_19 = arith.constant 0 : index
    %36 = vector.load %arg4[%c1_17, %c0_18, %c0_19] : memref<2x8x1xf32, #tpu.memory_space<vmem>>, vector<1x8x1xf32>
    %37 = vector.shape_cast %36 : vector<1x8x1xf32> to vector<8x1xf32>
    %38 = arith.truncf %33 : vector<8x36xf32> to vector<8x36xbf16>
    %39 = vector.extract_strided_slice %35 {offsets = [0, 0, 0], sizes = [1, 8, 8], strides = [1, 1, 1]} : vector<3x8x8xbf16> to vector<1x8x8xbf16>
    %40 = vector.shape_cast %39 : vector<1x8x8xbf16> to vector<8x8xbf16>
    %41 = vector.extract_strided_slice %38 {offsets = [0, 35], sizes = [8, 1], strides = [1, 1]} : vector<8x36xbf16> to vector<8x1xbf16>
    %42 = vector.extract_strided_slice %38 {offsets = [0, 0], sizes = [8, 35], strides = [1, 1]} : vector<8x36xbf16> to vector<8x35xbf16>
    %43 = tpu.concatenate %41, %42 in 1 : vector<8x1xbf16>, vector<8x35xbf16> -> vector<8x36xbf16>
    %cst_20 = arith.constant dense<0.000000e+00> : vector<8x36xf32>
    %44 = tpu.matmul %40, %43, %cst_20 {dimension_numbers = #tpu.dot_dimension_numbers<[1], [0], [0], [1], [0, 0, 1, 1], [], []>} : vector<8x8xbf16>, vector<8x36xbf16>, vector<8x36xf32> -> vector<8x36xf32>
    %45 = vector.extract_strided_slice %35 {offsets = [1, 0, 0], sizes = [1, 8, 8], strides = [1, 1, 1]} : vector<3x8x8xbf16> to vector<1x8x8xbf16>
    %46 = vector.shape_cast %45 : vector<1x8x8xbf16> to vector<8x8xbf16>
    %cst_21 = arith.constant dense<0.000000e+00> : vector<8x36xf32>
    %47 = tpu.matmul %46, %38, %cst_21 {dimension_numbers = #tpu.dot_dimension_numbers<[1], [0], [0], [1], [0, 0, 1, 1], [], []>} : vector<8x8xbf16>, vector<8x36xbf16>, vector<8x36xf32> -> vector<8x36xf32>
    %48 = arith.addf %44, %47 : vector<8x36xf32>
    %49 = vector.extract_strided_slice %35 {offsets = [2, 0, 0], sizes = [1, 8, 8], strides = [1, 1, 1]} : vector<3x8x8xbf16> to vector<1x8x8xbf16>
    %50 = vector.shape_cast %49 : vector<1x8x8xbf16> to vector<8x8xbf16>
    %51 = vector.extract_strided_slice %38 {offsets = [0, 1], sizes = [8, 35], strides = [1, 1]} : vector<8x36xbf16> to vector<8x35xbf16>
    %52 = vector.extract_strided_slice %38 {offsets = [0, 0], sizes = [8, 1], strides = [1, 1]} : vector<8x36xbf16> to vector<8x1xbf16>
    %53 = tpu.concatenate %51, %52 in 1 : vector<8x35xbf16>, vector<8x1xbf16> -> vector<8x36xbf16>
    %cst_22 = arith.constant dense<0.000000e+00> : vector<8x36xf32>
    %54 = tpu.matmul %50, %53, %cst_22 {dimension_numbers = #tpu.dot_dimension_numbers<[1], [0], [0], [1], [0, 0, 1, 1], [], []>} : vector<8x8xbf16>, vector<8x36xbf16>, vector<8x36xf32> -> vector<8x36xf32>
    %55 = arith.addf %48, %54 : vector<8x36xf32>
    %56 = vector.broadcast %37 : vector<8x1xf32> to vector<8x36xf32>
    %57 = arith.addf %55, %56 : vector<8x36xf32>
    %cst_23 = arith.constant 0.000000e+00 : f32
    %58 = vector.broadcast %cst_23 : f32 to vector<8x36xf32>
    %59 = arith.cmpf oge, %57, %58 : vector<8x36xf32>
    %cst_24 = arith.constant 0.00999999977 : f32
    %60 = vector.broadcast %cst_24 : f32 to vector<8x36xf32>
    %61 = arith.mulf %60, %57 : vector<8x36xf32>
    %62 = arith.select %59, %57, %61 : vector<8x36xi1>, vector<8x36xf32>
    %63 = vector.broadcast %0 : vector<1x36xf32> to vector<8x36xf32>
    %64 = arith.mulf %62, %63 : vector<8x36xf32>
    %65 = arith.addf %33, %64 : vector<8x36xf32>
    %c0_25 = arith.constant 0 : index
    %c0_26 = arith.constant 0 : index
    %66 = vector.load %arg5[%c0_25, %c0_26] : memref<8x36xf32, #tpu.memory_space<vmem>>, vector<8x36xf32>
    tpu.vector_store %arg5[%c0_25, %c0_26], %65 {strides = array<i32>} : memref<8x36xf32, #tpu.memory_space<vmem>>, vector<8x36xf32>,
    return
  }
  func.func @transform_0(%arg0: i32) -> (i32, i32) {
    %c0_i32 = arith.constant 0 : i32
    %c0_i32_0 = arith.constant 0 : i32
    return %c0_i32, %arg0 : i32, i32
  }
  func.func @transform_1(%arg0: i32) -> (i32, i32) {
    %c0_i32 = arith.constant 0 : i32
    %c0_i32_0 = arith.constant 0 : i32
    return %c0_i32, %arg0 : i32, i32
  }
  func.func @transform_2(%arg0: i32) -> (i32, i32, i32, i32) {
    %c0_i32 = arith.constant 0 : i32
    %c0_i32_0 = arith.constant 0 : i32
    %c0_i32_1 = arith.constant 0 : i32
    %c0_i32_2 = arith.constant 0 : i32
    %c0_i32_3 = arith.constant 0 : i32
    return %c0_i32, %c0_i32_0, %c0_i32_1, %c0_i32_2 : i32, i32, i32, i32
  }
  func.func @transform_3(%arg0: i32) -> (i32, i32, i32) {
    %c0_i32 = arith.constant 0 : i32
    %c0_i32_0 = arith.constant 0 : i32
    %c0_i32_1 = arith.constant 0 : i32
    %c0_i32_2 = arith.constant 0 : i32
    return %c0_i32, %c0_i32_0, %c0_i32_1 : i32, i32, i32
  }
  func.func @transform_4(%arg0: i32) -> (i32, i32) {
    %c0_i32 = arith.constant 0 : i32
    %c0_i32_0 = arith.constant 0 : i32
    return %c0_i32, %arg0 : i32, i32
  }
}

</mosaic_0001>

<llo_original>
// kernel: tpu_custom_call.1
$region0: #{tpu_custom_call.1}
  #allocation0 [shape = 'u32[]', space=smem, size = 0x4, offset = 0x4, fixed_abs, tag = 'smem constant byte address 0x4 - core index']
  #allocation1 [shape = 'u32[144,128]{1,0:T(1,128)}', space=vmem, size = 0x12000, scoped, tag = 'internal scratch']
  %s0 = inlined_call_operand.hbm [shape: f32[8,36], index: 0, kind: input, shape index: {}]
  %s1 = inlined_call_operand.vmem [shape: f32[1,36], index: 1, kind: input, shape index: {}]
  %s2 = inlined_call_operand.vmem [shape: bf16[2,3,8,8], index: 2, kind: input, shape index: {}]
  %s3 = inlined_call_operand.vmem [shape: f32[2,8,1], index: 3, kind: input, shape index: {}]
  %s4 = inlined_call_operand.hbm [shape: f32[8,36], index: 4, kind: output, shape index: {}]
  %s5 = sld [smem:[#allocation0]]
  $region30: #{tpu_custom_call.1} parent=0
    _
  %s7 = ssub.s32 1, %s5
  %s8 = scalar_select 0, %s7, %s5
  $region1: #{tpu_custom_call.1} parent=0
    #allocation2 [shape = 'u8[4096]{0}', space=vmem, size = 0x1000, scoped, tag = 'input window, operand 0, single buffered']
    #allocation3 [shape = 's32[1]{0}', space=sflag, size = 0x4, scoped, tag = 'scoped memory for tpu_custom_call.1']
    #allocation4 [shape = 's32[1]{0}', space=sflag, size = 0x4, scoped, tag = 'scoped memory for tpu_custom_call.1']
    #allocation5 [shape = 'u8[4096]{0}', space=vmem, size = 0x1000, scoped, tag = 'output window, operand 0, single buffered']
    %9 = vsyncpa [#allocation3], 0
    %10 = vsyncpa [#allocation4], 0
    // Predicated region
    $region2: #{tpu_custom_call.1} parent=1 // pred_check
      _
    $region3: #{tpu_custom_call.1} parent=1 // pred_check_branch
      %12 = sbr.rel (0) target = $region5
    $region4: #{tpu_custom_call.1} parent=1 // pred_region
      %s14 = ssub.s32 128, 128
      %15 = vsyncadd [#allocation3], %s14
      %s17 = sshll.u32 [#allocation2], 4
      %s18 = int_to_ptr.vmem [resolvable:$true] %s17
      %20 = dma.hbm_to_vmem [thread:$0]  %s0, 128, %s18, [#allocation3]
    $region5: #{tpu_custom_call.1} parent=1 // pred_fallthru
      _
    // Predicated region
    $region6: #{tpu_custom_call.1} parent=1 // pred_check
      _
    $region7: #{tpu_custom_call.1} parent=1 // pred_check_branch
      %22 = sbr.rel (0) target = $region9
    $region8: #{tpu_custom_call.1} parent=1 // pred_region
      _
    $region9: #{tpu_custom_call.1} parent=1 // pred_fallthru
      _
    // Predicated region
    $region10: #{tpu_custom_call.1} parent=1 // pred_check
      _
    $region11: #{tpu_custom_call.1} parent=1 // pred_check_branch
      %24 = sbr.rel (0) target = $region13
    $region12: #{tpu_custom_call.1} parent=1 // pred_region
      _
    $region13: #{tpu_custom_call.1} parent=1 // pred_fallthru
      _
    // Predicated region
    $region14: #{tpu_custom_call.1} parent=1 // pred_check
      _
    $region15: #{tpu_custom_call.1} parent=1 // pred_check_branch
      %26 = sbr.rel (0) target = $region17
    $region16: #{tpu_custom_call.1} parent=1 // pred_region
      _
    $region17: #{tpu_custom_call.1} parent=1 // pred_fallthru
      _
    // Predicated region
    $region18: #{tpu_custom_call.1} parent=1 // pred_check
      _
    $region19: #{tpu_custom_call.1} parent=1 // pred_check_branch
      %28 = sbr.rel (0) target = $region21
    $region20: #{tpu_custom_call.1} parent=1 // pred_region
      %29 = dma.done [#allocation3], 128
    $region21: #{tpu_custom_call.1} parent=1 // pred_fallthru
      _
    %v31 = vld [vmem:[%s1] sm:$0x1]
    %v32 = vld [vmem:[#allocation2] sm:$0xff]
    %v33 = vld [vmem:[%s2] sm:$0xf]
    %v34 = vld [vmem:[%s2 + $0x4] sm:$0xf]
    %v35 = vld [vmem:[%s2 + $0x8] sm:$0xf]
    %v36 = vld [vmem:[%s3] sm:$0xff]
    %v37 = vpack.c.bf16 %v32, %v32
    %39 = vrot.lane.b32.xlu0 %v37, 93
    %v40 = vpop.permute.xlu0 %39
    %41 = vrot.lane.b32.xlu0 %v37, 1
    %v42 = vpop.permute.xlu0 %41
    %vm43 = vcmask 7168
    %v46 = vsel %vm43, %v40, %v42
    %vm47 = vcmask 64512
    %v49 = vsel %vm47, %v34, 0
    %vm51 = vcmask 1043456
    %v53 = vsel %vm51, %v37, 0
    %55 = vmatprep.subr.bf16.mxu0 0
    %56 = vmatpush1.bf16.msra.mxu0 %v53
    %57 = vmatprep.subr.bf16.mxu0 0
    %58 = vmatpush1.bf16.msra.mxu0 0
    %59 = vmatprep.subr.bf16.mxu0 0
    %60 = vmatpush1.bf16.msra.mxu0 0
    %61 = vmatprep.subr.bf16.mxu0 0
    %62 = vmatpush1.bf16.msra.mxu0 0
    %63 = vmatprep.subr.bf16.mxu0 0
    %64 = vmatpush1.bf16.msra.mxu0 0
    %65 = vmatprep.subr.bf16.mxu0 0
    %66 = vmatpush1.bf16.msra.mxu0 0
    %67 = vmatprep.subr.bf16.mxu0 0
    %68 = vmatpush1.bf16.msra.mxu0 0
    %69 = vmatprep.subr.bf16.mxu0 0
    %70 = vmatpush1.bf16.msra.mxu0 0
    %71 = vmatprep.subr.bf16.mxu0 0
    %72 = vmatpush1.bf16.msra.mxu0 0
    %73 = vmatprep.subr.bf16.mxu0 0
    %74 = vmatpush1.bf16.msra.mxu0 0
    %75 = vmatprep.subr.bf16.mxu0 0
    %76 = vmatpush1.bf16.msra.mxu0 0
    %77 = vmatprep.subr.bf16.mxu0 0
    %78 = vmatpush1.bf16.msra.mxu0 0
    %79 = vmatprep.subr.bf16.mxu0 0
    %80 = vmatpush1.bf16.msra.mxu0 0
    %81 = vmatprep.subr.bf16.mxu0 0
    %82 = vmatpush1.bf16.msra.mxu0 0
    %83 = vmatprep.subr.bf16.mxu0 0
    %84 = vmatpush1.bf16.msra.mxu0 0
    %85 = vmatprep.subr.bf16.mxu0 0
    %86 = vmatpush1.bf16.msra.mxu0 0
    %87 = vmatprep.mubr.bf16.mxu0 0
    %88 = vmatmul.mubr.bf16.gmra.mrb[0].mxu0 %v49
    %v89 = vpop.f32.mrb[0].mxu0
    %v90 = vadd.f32 0.0, %v89
    %v91 = vpop.f32.mrb[0].mxu0
    %v92 = vpop.f32.mrb[0].mxu0
    %v93 = vpop.f32.mrb[0].mxu0
    %94 = vdwg.mxu0
    %v96 = vsel %vm47, %v33, 0
    %v98 = vsel %vm51, %v46, 0
    %100 = vmatprep.subr.bf16.mxu0 0
    %101 = vmatpush1.bf16.msra.mxu0 %v98
    %102 = vmatprep.subr.bf16.mxu0 0
    %103 = vmatpush1.bf16.msra.mxu0 0
    %104 = vmatprep.subr.bf16.mxu0 0
    %105 = vmatpush1.bf16.msra.mxu0 0
    %106 = vmatprep.subr.bf16.mxu0 0
    %107 = vmatpush1.bf16.msra.mxu0 0
    %108 = vmatprep.subr.bf16.mxu0 0
    %109 = vmatpush1.bf16.msra.mxu0 0
    %110 = vmatprep.subr.bf16.mxu0 0
    %111 = vmatpush1.bf16.msra.mxu0 0
    %112 = vmatprep.subr.bf16.mxu0 0
    %113 = vmatpush1.bf16.msra.mxu0 0
    %114 = vmatprep.subr.bf16.mxu0 0
    %115 = vmatpush1.bf16.msra.mxu0 0
    %116 = vmatprep.subr.bf16.mxu0 0
    %117 = vmatpush1.bf16.msra.mxu0 0
    %118 = vmatprep.subr.bf16.mxu0 0
    %119 = vmatpush1.bf16.msra.mxu0 0
    %120 = vmatprep.subr.bf16.mxu0 0
    %121 = vmatpush1.bf16.msra.mxu0 0
    %122 = vmatprep.subr.bf16.mxu0 0
    %123 = vmatpush1.bf16.msra.mxu0 0
    %124 = vmatprep.subr.bf16.mxu0 0
    %125 = vmatpush1.bf16.msra.mxu0 0
    %126 = vmatprep.subr.bf16.mxu0 0
    %127 = vmatpush1.bf16.msra.mxu0 0
    %128 = vmatprep.subr.bf16.mxu0 0
    %129 = vmatpush1.bf16.msra.mxu0 0
    %130 = vmatprep.subr.bf16.mxu0 0
    %131 = vmatpush1.bf16.msra.mxu0 0
    %132 = vmatprep.mubr.bf16.mxu0 0
    %133 = vmatmul.mubr.bf16.gmra.mrb[0].mxu0 %v96
    %v134 = vpop.f32.mrb[0].mxu0
    %v135 = vadd.f32 %v90, %v134
    %v136 = vpop.f32.mrb[0].mxu0
    %v137 = vpop.f32.mrb[0].mxu0
    %v138 = vpop.f32.mrb[0].mxu0
    %139 = vdwg.mxu0
    %140 = vrot.lane.b32.xlu0 %v37, 127
    %v141 = vpop.permute.xlu0 %140
    %142 = vrot.lane.b32.xlu0 %v37, 35
    %v143 = vpop.permute.xlu0 %142
    %vm144 = vcmask 285696
    %v147 = vsel %vm144, %v141, %v143
    %v149 = vsel %vm47, %v35, 0
    %v151 = vsel %vm51, %v147, 0
    %153 = vmatprep.subr.bf16.mxu0 0
    %154 = vmatpush1.bf16.msra.mxu0 %v151
    %155 = vmatprep.subr.bf16.mxu0 0
    %156 = vmatpush1.bf16.msra.mxu0 0
    %157 = vmatprep.subr.bf16.mxu0 0
    %158 = vmatpush1.bf16.msra.mxu0 0
    %159 = vmatprep.subr.bf16.mxu0 0
    %160 = vmatpush1.bf16.msra.mxu0 0
    %161 = vmatprep.subr.bf16.mxu0 0
    %162 = vmatpush1.bf16.msra.mxu0 0
    %163 = vmatprep.subr.bf16.mxu0 0
    %164 = vmatpush1.bf16.msra.mxu0 0
    %165 = vmatprep.subr.bf16.mxu0 0
    %166 = vmatpush1.bf16.msra.mxu0 0
    %167 = vmatprep.subr.bf16.mxu0 0
    %168 = vmatpush1.bf16.msra.mxu0 0
    %169 = vmatprep.subr.bf16.mxu0 0
    %170 = vmatpush1.bf16.msra.mxu0 0
    %171 = vmatprep.subr.bf16.mxu0 0
    %172 = vmatpush1.bf16.msra.mxu0 0
    %173 = vmatprep.subr.bf16.mxu0 0
    %174 = vmatpush1.bf16.msra.mxu0 0
    %175 = vmatprep.subr.bf16.mxu0 0
    %176 = vmatpush1.bf16.msra.mxu0 0
    %177 = vmatprep.subr.bf16.mxu0 0
    %178 = vmatpush1.bf16.msra.mxu0 0
    %179 = vmatprep.subr.bf16.mxu0 0
    %180 = vmatpush1.bf16.msra.mxu0 0
    %181 = vmatprep.subr.bf16.mxu0 0
    %182 = vmatpush1.bf16.msra.mxu0 0
    %183 = vmatprep.subr.bf16.mxu0 0
    %184 = vmatpush1.bf16.msra.mxu0 0
    %185 = vmatprep.mubr.bf16.mxu0 0
    %186 = vmatmul.mubr.bf16.gmra.mrb[0].mxu0 %v149
    %v187 = vpop.f32.mrb[0].mxu0
    %v188 = vadd.f32 0.0, %v187
    %v189 = vpop.f32.mrb[0].mxu0
    %v190 = vpop.f32.mrb[0].mxu0
    %v191 = vpop.f32.mrb[0].mxu0
    %192 = vdwg.mxu0
    %v193 = vadd.f32 %v135, %v188
    %195 = vset.pattern.permute.xlu0 0
    %196 = vperm.xlu0 %195, %v36
    %v197 = vpop.permute.xlu0 %196
    %v199 = vadd.f32 %v193, %v197
    %vm200 = vcmp.ge.f32.partialorder %v199, 0.0
    %v201 = vmul.f32 %v199, 0.01
    %v202 = vsel %vm200, %v199, %v201
    %v204 = vlaneseq
    %v205 = vshrl.u32 %v204, 7
    %v206 = vsub.s32 0, %v205
    %v207 = vrot.slane %v31, %v206
    %v209 = vmul.f32 %v202, %v207
    %v210 = vadd.f32 %v32, %v209
    %s211 = scalar_lea.vmem %s2, 12
    %v212 = vld [vmem:[%s211] sm:$0xf]
    %v213 = vld [vmem:[%s211 + $0x4] sm:$0xf]
    %v214 = vld [vmem:[%s211 + $0x8] sm:$0xf]
    %s215 = scalar_lea.vmem %s3, 8
    %v216 = vld [vmem:[%s215] sm:$0xff]
    %v217 = vpack.c.bf16 %v210, %v210
    %219 = vrot.lane.b32.xlu0 %v217, 93
    %v220 = vpop.permute.xlu0 %219
    %221 = vrot.lane.b32.xlu0 %v217, 1
    %v222 = vpop.permute.xlu0 %221
    %v225 = vsel %vm43, %v220, %v222
    %v227 = vsel %vm47, %v213, 0
    %v230 = vsel %vm51, %v217, 0
    %232 = vmatprep.subr.bf16.mxu0 0
    %233 = vmatpush1.bf16.msra.mxu0 %v230
    %234 = vmatprep.subr.bf16.mxu0 0
    %235 = vmatpush1.bf16.msra.mxu0 0
    %236 = vmatprep.subr.bf16.mxu0 0
    %237 = vmatpush1.bf16.msra.mxu0 0
    %238 = vmatprep.subr.bf16.mxu0 0
    %239 = vmatpush1.bf16.msra.mxu0 0
    %240 = vmatprep.subr.bf16.mxu0 0
    %241 = vmatpush1.bf16.msra.mxu0 0
    %242 = vmatprep.subr.bf16.mxu0 0
    %243 = vmatpush1.bf16.msra.mxu0 0
    %244 = vmatprep.subr.bf16.mxu0 0
    %245 = vmatpush1.bf16.msra.mxu0 0
    %246 = vmatprep.subr.bf16.mxu0 0
    %247 = vmatpush1.bf16.msra.mxu0 0
    %248 = vmatprep.subr.bf16.mxu0 0
    %249 = vmatpush1.bf16.msra.mxu0 0
    %250 = vmatprep.subr.bf16.mxu0 0
    %251 = vmatpush1.bf16.msra.mxu0 0
    %252 = vmatprep.subr.bf16.mxu0 0
    %253 = vmatpush1.bf16.msra.mxu0 0
    %254 = vmatprep.subr.bf16.mxu0 0
    %255 = vmatpush1.bf16.msra.mxu0 0
    %256 = vmatprep.subr.bf16.mxu0 0
    %257 = vmatpush1.bf16.msra.mxu0 0
    %258 = vmatprep.subr.bf16.mxu0 0
    %259 = vmatpush1.bf16.msra.mxu0 0
    %260 = vmatprep.subr.bf16.mxu0 0
    %261 = vmatpush1.bf16.msra.mxu0 0
    %262 = vmatprep.subr.bf16.mxu0 0
    %263 = vmatpush1.bf16.msra.mxu0 0
    %264 = vmatprep.mubr.bf16.mxu0 0
    %265 = vmatmul.mubr.bf16.gmra.mrb[0].mxu0 %v227
    %v266 = vpop.f32.mrb[0].mxu0
    %v267 = vadd.f32 0.0, %v266
    %v268 = vpop.f32.mrb[0].mxu0
    %v269 = vpop.f32.mrb[0].mxu0
    %v270 = vpop.f32.mrb[0].mxu0
    %271 = vdwg.mxu0
    %v273 = vsel %vm47, %v212, 0
    %v275 = vsel %vm51, %v225, 0
    %277 = vmatprep.subr.bf16.mxu0 0
    %278 = vmatpush1.bf16.msra.mxu0 %v275
    %279 = vmatprep.subr.bf16.mxu0 0
    %280 = vmatpush1.bf16.msra.mxu0 0
    %281 = vmatprep.subr.bf16.mxu0 0
    %282 = vmatpush1.bf16.msra.mxu0 0
    %283 = vmatprep.subr.bf16.mxu0 0
    %284 = vmatpush1.bf16.msra.mxu0 0
    %285 = vmatprep.subr.bf16.mxu0 0
    %286 = vmatpush1.bf16.msra.mxu0 0
    %287 = vmatprep.subr.bf16.mxu0 0
    %288 = vmatpush1.bf16.msra.mxu0 0
    %289 = vmatprep.subr.bf16.mxu0 0
    %290 = vmatpush1.bf16.msra.mxu0 0
    %291 = vmatprep.subr.bf16.mxu0 0
    %292 = vmatpush1.bf16.msra.mxu0 0
    %293 = vmatprep.subr.bf16.mxu0 0
    %294 = vmatpush1.bf16.msra.mxu0 0
    %295 = vmatprep.subr.bf16.mxu0 0
    %296 = vmatpush1.bf16.msra.mxu0 0
    %297 = vmatprep.subr.bf16.mxu0 0
    %298 = vmatpush1.bf16.msra.mxu0 0
    %299 = vmatprep.subr.bf16.mxu0 0
    %300 = vmatpush1.bf16.msra.mxu0 0
    %301 = vmatprep.subr.bf16.mxu0 0
    %302 = vmatpush1.bf16.msra.mxu0 0
    %303 = vmatprep.subr.bf16.mxu0 0
    %304 = vmatpush1.bf16.msra.mxu0 0
    %305 = vmatprep.subr.bf16.mxu0 0
    %306 = vmatpush1.bf16.msra.mxu0 0
    %307 = vmatprep.subr.bf16.mxu0 0
    %308 = vmatpush1.bf16.msra.mxu0 0
    %309 = vmatprep.mubr.bf16.mxu0 0
    %310 = vmatmul.mubr.bf16.gmra.mrb[0].mxu0 %v273
    %v311 = vpop.f32.mrb[0].mxu0
    %v312 = vadd.f32 %v267, %v311
    %v313 = vpop.f32.mrb[0].mxu0
    %v314 = vpop.f32.mrb[0].mxu0
    %v315 = vpop.f32.mrb[0].mxu0
    %316 = vdwg.mxu0
    %317 = vrot.lane.b32.xlu0 %v217, 127
    %v318 = vpop.permute.xlu0 %317
    %319 = vrot.lane.b32.xlu0 %v217, 35
    %v320 = vpop.permute.xlu0 %319
    %v323 = vsel %vm144, %v318, %v320
    %v325 = vsel %vm47, %v214, 0
    %v327 = vsel %vm51, %v323, 0
    %329 = vmatprep.subr.bf16.mxu0 0
    %330 = vmatpush1.bf16.msra.mxu0 %v327
    %331 = vmatprep.subr.bf16.mxu0 0
    %332 = vmatpush1.bf16.msra.mxu0 0
    %333 = vmatprep.subr.bf16.mxu0 0
    %334 = vmatpush1.bf16.msra.mxu0 0
    %335 = vmatprep.subr.bf16.mxu0 0
    %336 = vmatpush1.bf16.msra.mxu0 0
    %337 = vmatprep.subr.bf16.mxu0 0
    %338 = vmatpush1.bf16.msra.mxu0 0
    %339 = vmatprep.subr.bf16.mxu0 0
    %340 = vmatpush1.bf16.msra.mxu0 0
    %341 = vmatprep.subr.bf16.mxu0 0
    %342 = vmatpush1.bf16.msra.mxu0 0
    %343 = vmatprep.subr.bf16.mxu0 0
    %344 = vmatpush1.bf16.msra.mxu0 0
    %345 = vmatprep.subr.bf16.mxu0 0
    %346 = vmatpush1.bf16.msra.mxu0 0
    %347 = vmatprep.subr.bf16.mxu0 0
    %348 = vmatpush1.bf16.msra.mxu0 0
    %349 = vmatprep.subr.bf16.mxu0 0
    %350 = vmatpush1.bf16.msra.mxu0 0
    %351 = vmatprep.subr.bf16.mxu0 0
    %352 = vmatpush1.bf16.msra.mxu0 0
    %353 = vmatprep.subr.bf16.mxu0 0
    %354 = vmatpush1.bf16.msra.mxu0 0
    %355 = vmatprep.subr.bf16.mxu0 0
    %356 = vmatpush1.bf16.msra.mxu0 0
    %357 = vmatprep.subr.bf16.mxu0 0
    %358 = vmatpush1.bf16.msra.mxu0 0
    %359 = vmatprep.subr.bf16.mxu0 0
    %360 = vmatpush1.bf16.msra.mxu0 0
    %361 = vmatprep.mubr.bf16.mxu0 0
    %362 = vmatmul.mubr.bf16.gmra.mrb[0].mxu0 %v325
    %v363 = vpop.f32.mrb[0].mxu0
    %v364 = vadd.f32 0.0, %v363
    %v365 = vpop.f32.mrb[0].mxu0
    %v366 = vpop.f32.mrb[0].mxu0
    %v367 = vpop.f32.mrb[0].mxu0
    %368 = vdwg.mxu0
    %v369 = vadd.f32 %v312, %v364
    %371 = vset.pattern.permute.xlu0 0
    %372 = vperm.xlu0 %371, %v216
    %v373 = vpop.permute.xlu0 %372
    %v375 = vadd.f32 %v369, %v373
    %vm376 = vcmp.ge.f32.partialorder %v375, 0.0
    %v377 = vmul.f32 %v375, 0.01
    %v378 = vsel %vm376, %v375, %v377
    %v379 = vmul.f32 %v378, %v207
    %v380 = vadd.f32 %v210, %v379
    %vm381 = vcmask 293888
    %382 = vst.msk [vmem:[#allocation5] sm:$0xff] %vm381, %v380
    // Predicated region
    $region22: #{tpu_custom_call.1} parent=1 // pred_check
      _
    $region23: #{tpu_custom_call.1} parent=1 // pred_check_branch
      %384 = sbr.rel (0) target = $region25
    $region24: #{tpu_custom_call.1} parent=1 // pred_region
      %s386 = ssub.s32 128, 128
      %387 = vsyncadd [#allocation4], %s386
      %s389 = sshll.u32 [#allocation5], 4
      %s390 = int_to_ptr.vmem [resolvable:$true] %s389
      %392 = dma.vmem_to_hbm [thread:$0]  %s390, 128, %s4, [#allocation4]
    $region25: #{tpu_custom_call.1} parent=1 // pred_fallthru
      _
    // Predicated region
    $region26: #{tpu_custom_call.1} parent=1 // pred_check
      _
    $region27: #{tpu_custom_call.1} parent=1 // pred_check_branch
      %394 = sbr.rel (0) target = $region29
    $region28: #{tpu_custom_call.1} parent=1 // pred_region
      %395 = dma.done [#allocation4], 128
    $region29: #{tpu_custom_call.1} parent=1 // pred_fallthru
      _
    %396 = vsyncpa [#allocation3], 1
    %397 = vsyncpa [#allocation4], 1

</llo_original>
